<compile_context>
chip_gen: v7x
topology: tpu7x:2x2x1
jax: 0.10.0
libtpu: 0.0.40
codegen_flags: <defaults>
</compile_context>

<pallas_src>
import jax
import jax.numpy as jnp
from jax import lax
from jax.experimental import pallas as pl
from jax.experimental.pallas import tpu as pltpu

GROUPS = 32
EPS = 1e-5

_VMEM_LIMIT = None


def _vmem_limit_bytes():
    """Per-generation scoped-VMEM limit (~75% of physical, capped at 100 MiB)."""
    global _VMEM_LIMIT
    if _VMEM_LIMIT is None:
        cap = None
        try:
            cap = getattr(pltpu.get_tpu_info(), "vmem_capacity_bytes", None)
        except Exception:
            cap = None
        if not cap:
            cap = 64 << 20
        _VMEM_LIMIT = int(min(100 << 20, max(32 << 20, cap - cap // 4)))
    return _VMEM_LIMIT


def _mosaic_params():
    return pltpu.CompilerParams(dimension_semantics=("parallel",),
                                vmem_limit_bytes=_vmem_limit_bytes())


def _flat_col_mask(M, Wp, W):
    """(m % Wp) < W as an (M, 1) f32 mask, built from exact f32 arithmetic (avoids
    relying on vector integer div/rem lowering)."""
    m = lax.broadcasted_iota(jnp.float32, (M, 1), 0)
    q = jnp.floor((m + 0.5) * (1.0 / float(Wp)))       # == floor(m / Wp) exactly
    col = m - q * float(Wp)
    return (col < (float(W) - 0.5)).astype(jnp.float32)


def _group_masks(cout, groups, cpg):
    ch = lax.broadcasted_iota(jnp.int32, (cout, groups), 0)
    gp = lax.broadcasted_iota(jnp.int32, (cout, groups), 1)
    mcg = jnp.logical_and(ch >= gp * cpg, ch < (gp + 1) * cpg).astype(jnp.float32)
    gp2 = lax.broadcasted_iota(jnp.int32, (groups, cout), 0)
    ch2 = lax.broadcasted_iota(jnp.int32, (groups, cout), 1)
    mgc = jnp.logical_and(ch2 >= gp2 * cpg, ch2 < (gp2 + 1) * cpg).astype(jnp.float32)
    return mcg, mgc


def _group_scale_shift(acc, mask, gamma, beta, n_valid, cout, groups, eps):
    """Two-pass GroupNorm scale/shift from pre-norm activations `acc` (M, Cout) f32.

    `mask` (M, 1) zeroes wrap-around rows (None if every row is valid).  When
    groups == cout (the test config) the group reduction is the identity; otherwise
    it is two tiny matmuls run at precision=HIGHEST so the f32 sums stay f32."""
    cpg = cout // groups
    inv_n = 1.0 / float(n_valid)
    am = acc if mask is None else acc * mask
    colsum = jnp.sum(am, axis=0, keepdims=True)                          # (1, Cout)
    if cpg == 1:
        mean_c = colsum * inv_n
    else:
        mcg, mgc = _group_masks(cout, groups, cpg)
        gmean = jnp.dot(colsum, mcg, precision=lax.Precision.HIGHEST,
                        preferred_element_type=jnp.float32) * inv_n
        mean_c = jnp.dot(gmean, mgc, precision=lax.Precision.HIGHEST,
                         preferred_element_type=jnp.float32)
    diff = acc - mean_c
    if mask is not None:
        diff = diff * mask
    sqsum = jnp.sum(diff * diff, axis=0, keepdims=True)                  # (1, Cout)
    if cpg == 1:
        var_c = sqsum * inv_n
    else:
        gvar = jnp.dot(sqsum, mcg, precision=lax.Precision.HIGHEST,
                       preferred_element_type=jnp.float32) * inv_n
        var_c = jnp.dot(gvar, mgc, precision=lax.Precision.HIGHEST,
                        preferred_element_type=jnp.float32)
    inv_std = lax.rsqrt(var_c + eps)
    scale = gamma * inv_std
    shift = beta - mean_c * scale
    return scale, shift


# ------------------------- 1x1 conv + GroupNorm + ReLU (lateral / inner blocks) -------------
def _conv1x1_gn_relu_kernel(HW, Cout, groups, eps):
    n_valid = HW * (Cout // groups)

    def kernel(x_ref, w_ref, gamma_ref, beta_ref, o_ref):
        x = x_ref[0].astype(jnp.bfloat16)                                  # (HW, Cin)
        acc = jnp.dot(x, w_ref[...], preferred_element_type=jnp.float32)   # (HW, Cout)
        scale, shift = _group_scale_shift(acc, None, gamma_ref[...], beta_ref[...],
                                          n_valid, Cout, groups, eps)
        o_ref[0] = jnp.maximum(acc * scale + shift, 0.0).astype(o_ref.dtype)

    return kernel


def conv1x1_gn_relu(x, w, gamma, beta, groups=GROUPS, eps=EPS, out_dtype=jnp.bfloat16):
    """Conv2d(1x1, bias=False) + GroupNorm + ReLU as one (H*W, Cin)@(Cin, Cout) matmul.
    Output is bf16: it only feeds the next MXU matmul (3x3 block), halving HBM traffic."""
    N, H, W, Cin = x.shape
    Cout = w.shape[-1]
    HW = H * W
    xf = x.reshape(N, HW, Cin)                      # contiguous -> free HBM reshape
    wf = w.reshape(Cin, Cout).astype(jnp.bfloat16)
    out = pl.pallas_call(
        _conv1x1_gn_relu_kernel(HW, Cout, groups, eps),
        out_shape=jax.ShapeDtypeStruct((N, HW, Cout), out_dtype),
        grid=(N,),
        in_specs=[
            pl.BlockSpec((1, HW, Cin), lambda n: (n, 0, 0)),
            pl.BlockSpec((Cin, Cout), lambda n: (0, 0)),
            pl.BlockSpec((1, Cout), lambda n: (0, 0)),
            pl.BlockSpec((1, Cout), lambda n: (0, 0)),
        ],
        out_specs=pl.BlockSpec((1, HW, Cout), lambda n: (n, 0, 0)),
        compiler_params=_mosaic_params(),
    )(xf, wf, gamma.reshape(1, Cout).astype(jnp.float32),
      beta.reshape(1, Cout).astype(jnp.float32))
    return out.reshape(N, H, W, Cout)


# ------------------- 3x3 conv + GroupNorm + ReLU (+ fused top-down upsample+add) ------------
def _conv3x3_gn_relu_kernel(H, W, Hs, C, Cout, K, groups, eps, fuse_topdown):
    pad = (K - 1) // 2
    Wp = W + 2 * pad
    M = H * Wp
    R = (H + 2 * pad) * Wp + 2 * pad        # flat padded rows + wrap-around tail
    n_valid = H * W * (Cout // groups)

    def kernel(*refs):
        if fuse_topdown:
            (x_ref, td_ref, d_ref, w_ref, gamma_ref, beta_ref,
             o_ref, li_ref, xpad_ref, acc_ref) = refs
        else:
            (x_ref, w_ref, gamma_ref, beta_ref,
             o_ref, xpad_ref, acc_ref) = refs

        sdt = xpad_ref.dtype                                   # bf16 scratch
        # --- halo-only zeroing: top pad rows (+ left pad of row 0), bottom pad rows
        # --- and the wrap tail.  The interior is fully overwritten below.
        top = pad * Wp + pad
        xpad_ref[pl.ds(0, top), :] = jnp.zeros((top, C), sdt)
        bot = (H + pad) * Wp
        xpad_ref[pl.ds(bot, R - bot), :] = jnp.zeros((R - bot, C), sdt)
        zgap = jnp.zeros((2 * pad, C), sdt)

        if fuse_topdown:
            d = d_ref[...]                                     # (W, Ws) bf16 0/1 selection
            up_cache = {}                                      # one matmul per SOURCE row
        for h in range(H):
            if fuse_topdown:
                hs = (h * Hs) // H                             # nearest source row
                if hs not in up_cache:
                    up_cache[hs] = jnp.dot(d, td_ref[0, hs],
                                           preferred_element_type=jnp.float32)
                row = x_ref[0, h].astype(jnp.float32) + up_cache[hs]
                li_ref[0, h] = row.astype(li_ref.dtype)        # emit new last_inner
                row = row.astype(sdt)
            else:
                row = x_ref[0, h].astype(sdt)
            base = (h + pad) * Wp
            xpad_ref[pl.ds(base + pad, W), :] = row
            xpad_ref[pl.ds(base + pad + W, 2 * pad), :] = zgap  # right pad h / left pad h+1

        # --- K*K taps, each one (M, C) @ (C, Cout) MXU matmul, accumulated in-place.
        # TODO(synk): for small C (<128) stacking taps along the contraction dim would
        # raise MXU occupancy ~K*K-fold; kept per-tap for simplicity/portability.
        t = 0
        for dy in range(K):
            for dx in range(K):
                patch = xpad_ref[pl.ds(dy * Wp + dx, M), :]    # bf16
                prod = jnp.dot(patch, w_ref[dy, dx], preferred_element_type=jnp.float32)
                if t == 0:
                    acc_ref[...] = prod
                else:
                    acc_ref[...] += prod
                t += 1

        # --- GroupNorm over the valid columns only (mask built in-kernel, no DMA).
        mask = _flat_col_mask(M, Wp, W)
        acc = acc_ref[...]
        scale, shift = _group_scale_shift(acc, mask, gamma_ref[...], beta_ref[...],
                                          n_valid, Cout, groups, eps)

        # Normalize + affine + ReLU; store only the valid W columns of each row.
        # TODO(synk): with Cout=32 (test config) these are lane-masked stores; real FPN
        # Cout=256 makes them lane-dense.
        for h in range(H):
            r = acc_ref[pl.ds(h * Wp, W), :]
            o_ref[0, h] = jnp.maximum(r * scale + shift, 0.0).astype(o_ref.dtype)

    return kernel


def conv3x3_gn_relu(x, w, gamma, beta, top_down=None, groups=GROUPS, eps=EPS,
                    out_dtype=jnp.float32, inner_dtype=jnp.bfloat16):
    """Conv2d(KxK, pad=(K-1)//2, bias=False) + GroupNorm + ReLU.

    If `top_down` (the coarser FPN level) is given, the nearest-resize + add of the FPN
    top-down path is fused in and the summed map (new last_inner, bf16) is returned as a
    second output."""
    N, H, W, C = x.shape
    K = w.shape[0]
    Cout = w.shape[-1]
    pad = (K - 1) // 2
    Wp = W + 2 * pad
    M = H * Wp
    R = (H + 2 * pad) * Wp + 2 * pad
    fuse = top_down is not None

    wf = w.astype(jnp.bfloat16)
    gammaf = gamma.reshape(1, Cout).astype(jnp.float32)
    betaf = beta.reshape(1, Cout).astype(jnp.float32)

    inputs = [x]
    in_specs = [pl.BlockSpec((1, H, W, C), lambda n: (n, 0, 0, 0))]
    Hs = H
    if fuse:
        _, Hs, Ws, _ = top_down.shape
        src = (jnp.arange(W) * Ws) // W               # nearest source column per output col
        d_mat = (jnp.arange(Ws)[None, :] == src[:, None]).astype(jnp.bfloat16)  # (W, Ws)
        inputs += [top_down, d_mat]
        in_specs += [pl.BlockSpec((1, Hs, Ws, C), lambda n: (n, 0, 0, 0)),
                     pl.BlockSpec((W, Ws), lambda n: (0, 0))]
    inputs += [wf, gammaf, betaf]
    in_specs += [pl.BlockSpec((K, K, C, Cout), lambda n: (0, 0, 0, 0)),
                 pl.BlockSpec((1, Cout), lambda n: (0, 0)),
                 pl.BlockSpec((1, Cout), lambda n: (0, 0))]

    if fuse:
        out_shape = (jax.ShapeDtypeStruct((N, H, W, Cout), out_dtype),
                     jax.ShapeDtypeStruct((N, H, W, C), inner_dtype))
        out_specs = (pl.BlockSpec((1, H, W, Cout), lambda n: (n, 0, 0, 0)),
                     pl.BlockSpec((1, H, W, C), lambda n: (n, 0, 0, 0)))
    else:
        out_shape = jax.ShapeDtypeStruct((N, H, W, Cout), out_dtype)
        out_specs = pl.BlockSpec((1, H, W, Cout), lambda n: (n, 0, 0, 0))

    # TODO(synk): production-scale maps (e.g. 200x200x256) need grid=(N, H//TH) row-strip
    # tiling (marked 'parallel' for v7x's 2 TCs) with a split GroupNorm (per-strip partial
    # sum/sumsq then an apply pass), channel tiles of 256, and fori_loop row fills so the
    # resident VMEM stays under v7x's 64 MiB; full-map-per-step is fine at test scale.
    return pl.pallas_call(
        _conv3x3_gn_relu_kernel(H, W, Hs, C, Cout, K, groups, eps, fuse),
        out_shape=out_shape,
        grid=(N,),
        in_specs=in_specs,
        out_specs=out_specs,
        scratch_shapes=[pltpu.VMEM((R, C), jnp.bfloat16),
                        pltpu.VMEM((M, Cout), jnp.float32)],
        compiler_params=_mosaic_params(),
    )(*inputs)


# ----------------------- stride-2 conv + bias (LastLevelP6P7, computed directly) ------------
def _conv_s2_bias_kernel(H, W, C, Cout, K, relu_input):
    pad = (K - 1) // 2
    Wp = W + 2 * pad
    Ho = (H + 2 * pad - K) // 2 + 1
    Wo = (W + 2 * pad - K) // 2 + 1
    R = (H + 2 * pad) * Wp

    def kernel(x_ref, w_ref, b_ref, o_ref, xpad_ref):
        sdt = xpad_ref.dtype
        top = pad * Wp + pad
        xpad_ref[pl.ds(0, top), :] = jnp.zeros((top, C), sdt)
        bot = (H + pad) * Wp
        xpad_ref[pl.ds(bot, R - bot), :] = jnp.zeros((R - bot, C), sdt)
        zgap = jnp.zeros((2 * pad, C), sdt)
        for h in range(H):
            row = x_ref[0, h]
            if relu_input:
                row = jnp.maximum(row, 0.0)                     # fused F.relu(p6)
            base = (h + pad) * Wp
            xpad_ref[pl.ds(base + pad, W), :] = row.astype(sdt)
            xpad_ref[pl.ds(base + pad + W, 2 * pad), :] = zgap

        bias = b_ref[...]
        for ho in range(Ho):
            acc = None
            for dy in range(K):
                for dx in range(K):
                    start = (2 * ho + dy) * Wp + dx
                    if Wo > 1:
                        # even-column tap via a strided sublane read (no selection matmul)
                        patch = xpad_ref[pl.ds(start, Wo, stride=2), :]
                    else:
                        patch = xpad_ref[pl.ds(start, Wo), :]
                    prod = jnp.dot(patch, w_ref[dy, dx],
                                   preferred_element_type=jnp.float32)
                    acc = prod if acc is None else acc + prod
            o_ref[0, ho] = (acc + bias).astype(o_ref.dtype)

    return kernel


def conv3x3_s2_bias(x, w, b, relu_input=False):
    """Conv2d(3x3, stride=2, padding=1, bias=True), computed directly at the stride-2
    output resolution (optionally with F.relu fused onto the input, as used for p7)."""
    N, H, W, Cin = x.shape
    K = w.shape[0]
    Cout = w.shape[-1]
    pad = (K - 1) // 2
    Wp = W + 2 * pad
    Ho = (H + 2 * pad - K) // 2 + 1
    Wo = (W + 2 * pad - K) // 2 + 1
    R = (H + 2 * pad) * Wp
    return pl.pallas_call(
        _conv_s2_bias_kernel(H, W, Cin, Cout, K, relu_input),
        out_shape=jax.ShapeDtypeStruct((N, Ho, Wo, Cout), jnp.float32),
        grid=(N,),
        in_specs=[
            pl.BlockSpec((1, H, W, Cin), lambda n: (n, 0, 0, 0)),
            pl.BlockSpec((K, K, Cin, Cout), lambda n: (0, 0, 0, 0)),
            pl.BlockSpec((1, Cout), lambda n: (0, 0)),
        ],
        out_specs=pl.BlockSpec((1, Ho, Wo, Cout), lambda n: (n, 0, 0, 0)),
        scratch_shapes=[pltpu.VMEM((R, Cin), jnp.bfloat16)],
        compiler_params=_mosaic_params(),
    )(x, w.astype(jnp.bfloat16), b.reshape(1, Cout).astype(jnp.float32))


# ----------------------------------------- FPN glue -----------------------------------------
def init_fpn_params(key, in_channels_list, out_channels):
    ks = iter(jax.random.split(key, 6 * len(in_channels_list) + 4))
    inner, layer = [], []
    for cin in in_channels_list:
        w1 = 0.1 * jax.random.normal(next(ks), (1, 1, cin, out_channels), jnp.float32)
        g1 = 1.0 + 0.05 * jax.random.normal(next(ks), (out_channels,), jnp.float32)
        b1 = 0.05 * jax.random.normal(next(ks), (out_channels,), jnp.float32)
        inner.append((w1, g1, b1))
        w3 = 0.1 * jax.random.normal(next(ks), (3, 3, out_channels, out_channels), jnp.float32)
        g3 = 1.0 + 0.05 * jax.random.normal(next(ks), (out_channels,), jnp.float32)
        b3 = 0.05 * jax.random.normal(next(ks), (out_channels,), jnp.float32)
        layer.append((w3, g3, b3))
    p6w = 0.1 * jax.random.normal(next(ks), (3, 3, out_channels, out_channels), jnp.float32)
    p6b = 0.05 * jax.random.normal(next(ks), (out_channels,), jnp.float32)
    p7w = 0.1 * jax.random.normal(next(ks), (3, 3, out_channels, out_channels), jnp.float32)
    p7b = 0.05 * jax.random.normal(next(ks), (out_channels,), jnp.float32)
    return {"inner": inner, "layer": layer, "p6": (p6w, p6b), "p7": (p7w, p7b)}


def fpn_forward(xs, params):
    inner, layer = params["inner"], params["layer"]
    last_inner = conv1x1_gn_relu(xs[-1], *inner[-1])                     # bf16 intermediate
    results = [conv3x3_gn_relu(last_inner, *layer[-1])]                  # f32 output
    for i in range(len(xs) - 2, -1, -1):
        lateral = conv1x1_gn_relu(xs[i], *inner[i])                      # bf16 intermediate
        # fused: nearest-upsample(last_inner) + lateral + 3x3 conv + GN + ReLU,
        # also emitting the summed map as the next level's top-down input.
        out_i, last_inner = conv3x3_gn_relu(lateral, *layer[i], top_down=last_inner)
        results.insert(0, out_i)
    # LastLevelP6P7: in_channels == out_channels -> use_P5 is True, so the input is p5.
    p5 = results[-1]
    p6 = conv3x3_s2_bias(p5, *params["p6"], relu_input=False)
    p7 = conv3x3_s2_bias(p6, *params["p7"], relu_input=True)
    results.extend([p6, p7])
    return tuple(results)


if __name__ == "__main__":
    key = jax.random.PRNGKey(0)
    kx, kp = jax.random.split(key)
    in_channels_list = [8, 16, 32]
    out_channels = 32  # must be divisible by GroupNorm's 32 groups
    batch = 2
    spatial = [16, 8, 4]
    xkeys = jax.random.split(kx, len(in_channels_list))
    xs = [
        jax.random.normal(xkeys[i], (batch, spatial[i], spatial[i], in_channels_list[i]),
                          jnp.float32)
        for i in range(len(in_channels_list))
    ]
    params = init_fpn_params(kp, in_channels_list, out_channels)
    outs = fpn_forward(xs, params)
    jax.block_until_ready(outs)
    # expected pyramid: (2,16,16,32) (2,8,8,32) (2,4,4,32) (2,2,2,32) (2,1,1,32)
    assert tuple(o.shape for o in outs) == (
        (2, 16, 16, 32), (2, 8, 8, 32), (2, 4, 4, 32), (2, 2, 2, 32), (2, 1, 1, 32))
    assert all(bool(jnp.isfinite(o).all()) for o in outs)
    print("KERNEL_OK")
</pallas_src>

<mosaic_0001>
module attributes {stable_mosaic.version = 11 : i64} {
  func.func @kernel(%arg0: i32, %arg1: memref<1x16x32xf32, #tpu.memory_space<vmem>>, %arg2: memref<32x32xbf16, #tpu.memory_space<vmem>>, %arg3: memref<1x32xf32, #tpu.memory_space<vmem>>, %arg4: memref<1x32xf32, #tpu.memory_space<vmem>>, %arg5: memref<1x16x32xbf16, #tpu.memory_space<vmem>>) attributes {dimension_semantics = [#tpu.dimension_semantics<parallel>], iteration_bounds = array<i64: 2>, scalar_prefetch = 0 : i64, scratch_operands = 0 : i64, tpu.core_type = #tpu.core_type<tc>, window_params = [{transform_indices = @transform_0, window_bounds = array<i64: 1, 16, 32>}, {pipeline_mode = #tpu.pipeline_mode<synchronous>, transform_indices = @transform_1, window_bounds = array<i64: 32, 32>}, {pipeline_mode = #tpu.pipeline_mode<synchronous>, transform_indices = @transform_2, window_bounds = array<i64: 1, 32>}, {pipeline_mode = #tpu.pipeline_mode<synchronous>, transform_indices = @transform_3, window_bounds = array<i64: 1, 32>}, {transform_indices = @transform_4, window_bounds = array<i64: 1, 16, 32>}]} {
    %c0 = arith.constant 0 : index
    %c0_0 = arith.constant 0 : index
    %c0_1 = arith.constant 0 : index
    %0 = vector.load %arg1[%c0, %c0_0, %c0_1] : memref<1x16x32xf32, #tpu.memory_space<vmem>>, vector<1x16x32xf32>
    %1 = vector.shape_cast %0 : vector<1x16x32xf32> to vector<16x32xf32>
    %2 = arith.truncf %1 : vector<16x32xf32> to vector<16x32xbf16>
    %c0_2 = arith.constant 0 : index
    %c0_3 = arith.constant 0 : index
    %3 = vector.load %arg2[%c0_2, %c0_3] : memref<32x32xbf16, #tpu.memory_space<vmem>>, vector<32x32xbf16>
    %cst = arith.constant dense<0.000000e+00> : vector<16x32xf32>
    %4 = tpu.matmul %2, %3, %cst {dimension_numbers = #tpu.dot_dimension_numbers<[1], [0], [0], [1], [0, 0, 1, 1], [], []>} : vector<16x32xbf16>, vector<32x32xbf16>, vector<16x32xf32> -> vector<16x32xf32>
    %c0_4 = arith.constant 0 : index
    %c0_5 = arith.constant 0 : index
    %5 = vector.load %arg3[%c0_4, %c0_5] : memref<1x32xf32, #tpu.memory_space<vmem>>, vector<1x32xf32>
    %c0_6 = arith.constant 0 : index
    %c0_7 = arith.constant 0 : index
    %6 = vector.load %arg4[%c0_6, %c0_7] : memref<1x32xf32, #tpu.memory_space<vmem>>, vector<1x32xf32>
    %cst_8 = arith.constant dense<0.000000e+00> : vector<32xf32>
    %7 = vector.multi_reduction <add>, %4, %cst_8 [0] : vector<16x32xf32> to vector<32xf32>
    %8 = vector.shape_cast %7 : vector<32xf32> to vector<1x32xf32>
    %cst_9 = arith.constant 6.250000e-02 : f32
    %9 = vector.broadcast %cst_9 : f32 to vector<1x32xf32>
    %10 = arith.mulf %8, %9 : vector<1x32xf32>
    %11 = vector.broadcast %10 : vector<1x32xf32> to vector<16x32xf32>
    %12 = arith.subf %4, %11 : vector<16x32xf32>
    %13 = arith.mulf %12, %12 : vector<16x32xf32>
    %cst_10 = arith.constant dense<0.000000e+00> : vector<32xf32>
    %14 = vector.multi_reduction <add>, %13, %cst_10 [0] : vector<16x32xf32> to vector<32xf32>
    %15 = vector.shape_cast %14 : vector<32xf32> to vector<1x32xf32>
    %cst_11 = arith.constant 6.250000e-02 : f32
    %16 = vector.broadcast %cst_11 : f32 to vector<1x32xf32>
    %17 = arith.mulf %15, %16 : vector<1x32xf32>
    %cst_12 = arith.constant 9.99999974E-6 : f32
    %18 = vector.broadcast %cst_12 : f32 to vector<1x32xf32>
    %19 = arith.addf %17, %18 : vector<1x32xf32>
    %20 = math.rsqrt %19 : vector<1x32xf32>
    %21 = arith.mulf %5, %20 : vector<1x32xf32>
    %22 = arith.mulf %10, %21 : vector<1x32xf32>
    %23 = arith.subf %6, %22 : vector<1x32xf32>
    %24 = vector.broadcast %21 : vector<1x32xf32> to vector<16x32xf32>
    %25 = arith.mulf %4, %24 : vector<16x32xf32>
    %26 = vector.broadcast %23 : vector<1x32xf32> to vector<16x32xf32>
    %27 = arith.addf %25, %26 : vector<16x32xf32>
    %cst_13 = arith.constant 0.000000e+00 : f32
    %28 = vector.broadcast %cst_13 : f32 to vector<16x32xf32>
    %29 = arith.maximumf %27, %28 : vector<16x32xf32>
    %30 = arith.truncf %29 : vector<16x32xf32> to vector<16x32xbf16>
    %c0_14 = arith.constant 0 : index
    %c0_15 = arith.constant 0 : index
    %c0_16 = arith.constant 0 : index
    %31 = vector.load %arg5[%c0_14, %c0_15, %c0_16] : memref<1x16x32xbf16, #tpu.memory_space<vmem>>, vector<1x16x32xbf16>
    %32 = vector.shape_cast %31 : vector<1x16x32xbf16> to vector<16x32xbf16>
    %33 = vector.shape_cast %30 : vector<16x32xbf16> to vector<1x16x32xbf16>
    tpu.vector_store %arg5[%c0_14, %c0_15, %c0_16], %33 {strides = array<i32>} : memref<1x16x32xbf16, #tpu.memory_space<vmem>>, vector<1x16x32xbf16>,
    return
  }
  func.func @transform_0(%arg0: i32) -> (i32, i32, i32) {
    %c0_i32 = arith.constant 0 : i32
    %c0_i32_0 = arith.constant 0 : i32
    %c0_i32_1 = arith.constant 0 : i32
    return %arg0, %c0_i32, %c0_i32_0 : i32, i32, i32
  }
  func.func @transform_1(%arg0: i32) -> (i32, i32) {
    %c0_i32 = arith.constant 0 : i32
    %c0_i32_0 = arith.constant 0 : i32
    %c0_i32_1 = arith.constant 0 : i32
    return %c0_i32, %c0_i32_0 : i32, i32
  }
  func.func @transform_2(%arg0: i32) -> (i32, i32) {
    %c0_i32 = arith.constant 0 : i32
    %c0_i32_0 = arith.constant 0 : i32
    %c0_i32_1 = arith.constant 0 : i32
    return %c0_i32, %c0_i32_0 : i32, i32
  }
  func.func @transform_3(%arg0: i32) -> (i32, i32) {
    %c0_i32 = arith.constant 0 : i32
    %c0_i32_0 = arith.constant 0 : i32
    %c0_i32_1 = arith.constant 0 : i32
    return %c0_i32, %c0_i32_0 : i32, i32
  }
  func.func @transform_4(%arg0: i32) -> (i32, i32, i32) {
    %c0_i32 = arith.constant 0 : i32
    %c0_i32_0 = arith.constant 0 : i32
    %c0_i32_1 = arith.constant 0 : i32
    return %arg0, %c0_i32, %c0_i32_0 : i32, i32, i32
  }
}

</mosaic_0001>

<llo_original>
// kernel: tpu_custom_call.1
$region0: #{tpu_custom_call.1}
  #allocation0 [shape = 'u32[]', space=smem, size = 0x4, offset = 0x4, fixed_abs, tag = 'smem constant byte address 0x4 - core index']
  #allocation1 [shape = 'u32[144,128]{1,0:T(1,128)}', space=vmem, size = 0x12000, scoped, tag = 'internal scratch']
  %s0 = inlined_call_operand.hbm [shape: f32[2,16,32], index: 0, kind: input, shape index: {}]
  %s1 = inlined_call_operand.hbm [shape: bf16[32,32], index: 1, kind: input, shape index: {}]
  %s2 = inlined_call_operand.vmem [shape: f32[1,32], index: 2, kind: input, shape index: {}]
  %s3 = inlined_call_operand.vmem [shape: f32[1,32], index: 3, kind: input, shape index: {}]
  %s4 = inlined_call_operand.hbm [shape: bf16[2,16,32], index: 4, kind: output, shape index: {}]
  %s5 = sld [smem:[#allocation0]]
  $region57: #{tpu_custom_call.1} parent=0
    _
  %s7 = ssub.s32 1, %s5
  %s8 = scalar_select 0, %s7, %s5
  $region1: #{tpu_custom_call.1} parent=0
    #allocation2 [shape = 'u8[16384]{0}', space=vmem, size = 0x4000, scoped, tag = 'input window, operand 0']
    #allocation3 [shape = 's32[2]{0}', space=sflag, size = 0x8, scoped, tag = 'scoped memory for tpu_custom_call.1']
    #allocation4 [shape = 's32[2]{0}', space=sflag, size = 0x8, scoped, tag = 'scoped memory for tpu_custom_call.1']
    #allocation5 [shape = 'u8[8192]{0}', space=vmem, size = 0x2000, scoped, tag = 'input window, operand 1, single buffered']
    #allocation6 [shape = 's32[1]{0}', space=sflag, size = 0x4, scoped, tag = 'scoped memory for tpu_custom_call.1']
    #allocation7 [shape = 'u8[8192]{0}', space=vmem, size = 0x2000, scoped, tag = 'output window, operand 0']
    %9 = vsyncpa [#allocation3], 0
    %s10 = scalar_lea.sflag [#allocation3], 1
    %11 = vsyncpa %s10, 0
    %12 = vsyncpa [#allocation6], 0
    %13 = vsyncpa [#allocation4], 0
    %s14 = scalar_lea.sflag [#allocation4], 1
    %15 = vsyncpa %s14, 0
    loop: start=0, step=1, limit=4
    $region2: #{tpu_custom_call.1} parent=1 // loop_pre_header
      _
    $region3: #{tpu_custom_call.1} parent=1 // loop_header
      %s17 = sphi 0, %s21
      %p18 = scmp.ge.s32.totalorder %s17, 4
      %s27 = sphi 0, %s29
      %s30 = sphi 0, %s27
      %s31 = sphi 0, %s30
      %s47 = sphi 0, %s31
      %s51 = sphi 0, %s51
      %s53 = sphi 0, %s51
      %s54 = sphi 0, %s53
      %s68 = sphi 0, %s54
      %s72 = sphi 0, %s72
      %s74 = sphi 0, %s72
      %s75 = sphi 0, %s74
      %s89 = sphi 0, %s75
      %s93 = sphi 0, %s93
      %s95 = sphi 0, %s93
      %s96 = sphi 0, %s95
      %s110 = sphi 0, %s96
      %s116 = sphi 0, %s118
      %s119 = sphi 0, %s116
      %s120 = sphi 0, %s119
      %s136 = sphi 0, %s120
    $region4: #{tpu_custom_call.1} parent=1 // loop_header_branch
      %20 = sbr.rel (%p18) target = $region8
    $region5: #{tpu_custom_call.1} parent=1 // loop_body
      %s22 = ssub.s32 %s17, 1
      %s23 = ssub.s32 %s17, 2
      %s24 = sadd.s32 %s17, 1
      %s25 = ssub.s32 %s17, %s24
      %p26 = scmp.eq.s32.totalorder %s25, 0
      %s28 = sadd.s32 %s27, 1
      %s29 = scalar_select %p26, %s27, %s28
      %p32 = pneg %p26
      %p33 = scmp.eq.s32.totalorder %s17, 1
      %p34 = por %p32, %p33
      %p35 = scmp.ne.s32.totalorder %s27, %s30
      %p36 = scmp.eq.s32.totalorder %s17, 0
      %p37 = por %p35, %p36
      %p38 = scmp.ne.s32.totalorder %s27, %s30
      %p39 = scmp.eq.s32.totalorder %s22, 1
      %p40 = por %p38, %p39
      %p41 = scmp.ne.s32.totalorder %s30, %s31
      %p42 = scmp.eq.s32.totalorder %s22, 0
      %p43 = por %p41, %p42
      %p44 = scmp.ne.s32.totalorder %s30, %s31
      %p45 = scmp.eq.s32.totalorder %s23, 1
      %p46 = por %p44, %p45
      %p48 = scmp.ne.s32.totalorder %s31, %s47
      %p49 = scmp.eq.s32.totalorder %s23, 0
      %p50 = por %p48, %p49
      %s52 = sadd.s32 %s51, 1
      %p55 = scmp.eq.s32.totalorder %s17, 1
      %p56 = scmp.ne.s32.totalorder %s51, %s53
      %p57 = scmp.eq.s32.totalorder %s17, 0
      %p58 = por %p56, %p57
      %p59 = scmp.ne.s32.totalorder %s51, %s53
      %p60 = scmp.eq.s32.totalorder %s22, 1
      %p61 = por %p59, %p60
      %p62 = scmp.ne.s32.totalorder %s53, %s54
      %p63 = scmp.eq.s32.totalorder %s22, 0
      %p64 = por %p62, %p63
      %p65 = scmp.ne.s32.totalorder %s53, %s54
      %p66 = scmp.eq.s32.totalorder %s23, 1
      %p67 = por %p65, %p66
      %p69 = scmp.ne.s32.totalorder %s54, %s68
      %p70 = scmp.eq.s32.totalorder %s23, 0
      %p71 = por %p69, %p70
      %s73 = sadd.s32 %s72, 1
      %p76 = scmp.eq.s32.totalorder %s17, 1
      %p77 = scmp.ne.s32.totalorder %s72, %s74
      %p78 = scmp.eq.s32.totalorder %s17, 0
      %p79 = por %p77, %p78
      %p80 = scmp.ne.s32.totalorder %s72, %s74
      %p81 = scmp.eq.s32.totalorder %s22, 1
      %p82 = por %p80, %p81
      %p83 = scmp.ne.s32.totalorder %s74, %s75
      %p84 = scmp.eq.s32.totalorder %s22, 0
      %p85 = por %p83, %p84
      %p86 = scmp.ne.s32.totalorder %s74, %s75
      %p87 = scmp.eq.s32.totalorder %s23, 1
      %p88 = por %p86, %p87
      %p90 = scmp.ne.s32.totalorder %s75, %s89
      %p91 = scmp.eq.s32.totalorder %s23, 0
      %p92 = por %p90, %p91
      %s94 = sadd.s32 %s93, 1
      %p97 = scmp.eq.s32.totalorder %s17, 1
      %p98 = scmp.ne.s32.totalorder %s93, %s95
      %p99 = scmp.eq.s32.totalorder %s17, 0
      %p100 = por %p98, %p99
      %p101 = scmp.ne.s32.totalorder %s93, %s95
      %p102 = scmp.eq.s32.totalorder %s22, 1
      %p103 = por %p101, %p102
      %p104 = scmp.ne.s32.totalorder %s95, %s96
      %p105 = scmp.eq.s32.totalorder %s22, 0
      %p106 = por %p104, %p105
      %p107 = scmp.ne.s32.totalorder %s95, %s96
      %p108 = scmp.eq.s32.totalorder %s23, 1
      %p109 = por %p107, %p108
      %p111 = scmp.ne.s32.totalorder %s96, %s110
      %p112 = scmp.eq.s32.totalorder %s23, 0
      %p113 = por %p111, %p112
      %s114 = ssub.s32 %s17, %s24
      %p115 = scmp.eq.s32.totalorder %s114, 0
      %s117 = sadd.s32 %s116, 1
      %s118 = scalar_select %p115, %s116, %s117
      %p121 = pneg %p115
      %p122 = scmp.eq.s32.totalorder %s17, 1
      %p123 = por %p121, %p122
      %p124 = scmp.ne.s32.totalorder %s116, %s119
      %p125 = scmp.eq.s32.totalorder %s17, 0
      %p126 = por %p124, %p125
      %p127 = scmp.ne.s32.totalorder %s116, %s119
      %p128 = scmp.eq.s32.totalorder %s22, 1
      %p129 = por %p127, %p128
      %p130 = scmp.ne.s32.totalorder %s119, %s120
      %p131 = scmp.eq.s32.totalorder %s22, 0
      %p132 = por %p130, %p131
      %p133 = scmp.ne.s32.totalorder %s119, %s120
      %p134 = scmp.eq.s32.totalorder %s23, 1
      %p135 = por %p133, %p134
      %p137 = scmp.ne.s32.totalorder %s120, %s136
      %p138 = scmp.eq.s32.totalorder %s23, 0
      %p139 = por %p137, %p138
      %p140 = scmp.le.s32.totalorder 1, %s17
      %p141 = scmp.lt.s32.totalorder %s17, 3
      %p142 = pnand %p140, %p141
      %p143 = pneg %p142
      // Predicated region
      $region9: #{tpu_custom_call.1} parent=5 // pred_check
        _
      $region10: #{tpu_custom_call.1} parent=5 // pred_check_branch
        %145 = sbr.rel (%p142) target = $region12
      $region11: #{tpu_custom_call.1} parent=5 // pred_region
        %s146 = ssub.s32 %s17, 1
        // Predicated region
        $region13: #{tpu_custom_call.1} parent=11 // pred_check
          %p147 = pneg %p64
        $region14: #{tpu_custom_call.1} parent=11 // pred_check_branch
          %149 = sbr.rel (%p147) target = $region16
        $region15: #{tpu_custom_call.1} parent=11 // pred_region
          %s151 = ssub.s32 256, 256
          %152 = vsyncadd [#allocation6], %s151
          %s153 = sshll.u32 [#allocation5], 4
          %s154 = int_to_ptr.vmem [resolvable:$true] %s153
          %159 = dma.hbm_to_vmem [thread:$0]  %s1, 256, %s154, [#allocation6], 64, 64, 4
        $region16: #{tpu_custom_call.1} parent=11 // pred_fallthru
          _
        // Predicated region
        $region17: #{tpu_custom_call.1} parent=11 // pred_check
          %p160 = pneg %p85
        $region18: #{tpu_custom_call.1} parent=11 // pred_check_branch
          %162 = sbr.rel (%p160) target = $region20
        $region19: #{tpu_custom_call.1} parent=11 // pred_region
          _
        $region20: #{tpu_custom_call.1} parent=11 // pred_fallthru
          _
        // Predicated region
        $region21: #{tpu_custom_call.1} parent=11 // pred_check
          %p163 = pneg %p106
        $region22: #{tpu_custom_call.1} parent=11 // pred_check_branch
          %165 = sbr.rel (%p163) target = $region24
        $region23: #{tpu_custom_call.1} parent=11 // pred_region
          _
        $region24: #{tpu_custom_call.1} parent=11 // pred_fallthru
          _
      $region12: #{tpu_custom_call.1} parent=5 // pred_fallthru
        _
      %p166 = scmp.lt.s32.totalorder %s17, 2
      // Predicated region
      $region25: #{tpu_custom_call.1} parent=5 // pred_check
        %p167 = pneg %p166
      $region26: #{tpu_custom_call.1} parent=5 // pred_check_branch
        %169 = sbr.rel (%p167) target = $region28
      $region27: #{tpu_custom_call.1} parent=5 // pred_region
        // Predicated region
        $region29: #{tpu_custom_call.1} parent=27 // pred_check
          %p170 = pneg %p37
        $region30: #{tpu_custom_call.1} parent=27 // pred_check_branch
          %172 = sbr.rel (%p170) target = $region32
        $region31: #{tpu_custom_call.1} parent=27 // pred_region
          %s173 = sand.u32 %s27, 1
          %s174 = scalar_lea.sflag [#allocation3], %s173
          %s175 = sand.u32 %s27, 1
          %s176 = smul.addr %s175, 16
          %s177 = scalar_lea.vmem [#allocation2], %s176
          %s179 = ssub.s32 256, 256
          %180 = vsyncadd %s174, %s179
          %s181 = smul.addr %s17, 2
          %s182 = smul.addr %s181, 128
          %s183 = scalar_lea.hbm %s0, %s182
          %s184 = sshll.u32 %s177, 4
          %s185 = int_to_ptr.vmem [resolvable:$true] %s184
          %190 = dma.hbm_to_vmem [thread:$0]  %s183, 256, %s185, %s174, 128, 128, 8
        $region32: #{tpu_custom_call.1} parent=27 // pred_fallthru
          _
      $region28: #{tpu_custom_call.1} parent=5 // pred_fallthru
        _
      %p191 = scmp.le.s32.totalorder 1, %s17
      %p192 = scmp.lt.s32.totalorder %s17, 3
      %p193 = pnand %p191, %p192
      %p194 = pneg %p193
      // Predicated region
      $region33: #{tpu_custom_call.1} parent=5 // pred_check
        _
      $region34: #{tpu_custom_call.1} parent=5 // pred_check_branch
        %196 = sbr.rel (%p193) target = $region36
      $region35: #{tpu_custom_call.1} parent=5 // pred_region
        %s197 = ssub.s32 %s17, 1
        %s198 = sand.u32 %s30, 1
        %s199 = scalar_lea.sflag [#allocation3], %s198
        %s200 = sand.u32 %s30, 1
        %s201 = smul.addr %s200, 16
        %s202 = scalar_lea.vmem [#allocation2], %s201
        // Predicated region
        $region37: #{tpu_custom_call.1} parent=35 // pred_check
          %p203 = pneg %p43
        $region38: #{tpu_custom_call.1} parent=35 // pred_check_branch
          %205 = sbr.rel (%p203) target = $region40
        $region39: #{tpu_custom_call.1} parent=35 // pred_region
          %206 = dma.done %s199, 256
        $region40: #{tpu_custom_call.1} parent=35 // pred_fallthru
          _
        // Predicated region
        $region41: #{tpu_custom_call.1} parent=35 // pred_check
          %p207 = pneg %p64
        $region42: #{tpu_custom_call.1} parent=35 // pred_check_branch
          %209 = sbr.rel (%p207) target = $region44
        $region43: #{tpu_custom_call.1} parent=35 // pred_region
          %210 = dma.done [#allocation6], 256
        $region44: #{tpu_custom_call.1} parent=35 // pred_fallthru
          _
        %s211 = sand.u32 %s30, 1
        %s212 = scalar_lea.sflag [#allocation3], %s211
        %s213 = sand.u32 %s30, 1
        %s214 = smul.addr %s213, 16
        %s215 = scalar_lea.vmem [#allocation2], %s214
        %p216 = pneg %p43
        %p217 = pneg %p40
        %p218 = pneg %p64
        %p219 = pneg %p61
        %p220 = pneg %p85
        %p221 = pneg %p82
        %p222 = pneg %p106
        %p223 = pneg %p103
        %p224 = pneg %p132
        %p225 = pneg %p129
        %s226 = sand.u32 %s119, 1
        %s227 = scalar_lea.sflag [#allocation4], %s226
        %s228 = sand.u32 %s119, 1
        %s229 = smul.addr %s228, 8
        %s230 = scalar_lea.vmem [#allocation7], %s229
        %v232 = vld [vmem:[%s202] sm:$0xff]
        %v233 = vld [vmem:[%s202 + $0x8] sm:$0xff]
        %v234 = vpack.c.bf16 %v233, %v232
        %v235 = vld [vmem:[#allocation5] sm:$0xf]
        %v236 = vld [vmem:[#allocation5 + $0x4] sm:$0xf]
        %v237 = vld [vmem:[#allocation5 + $0x8] sm:$0xf]
        %v238 = vld [vmem:[#allocation5 + $0xc] sm:$0xf]
        %v243 = vunpack.c.l.b16 %v235
        %v244 = vunpack.c.l.b16 %v236
        %v245 = vunpack.c.l.b16 %v237
        %v246 = vunpack.c.l.b16 %v238
        %v247 = vpack.c.b16 %v244, %v243
        %v248 = vpack.c.b16 %v246, %v245
        %vm251 = vcmask 261120
        %v253 = vsel %vm251, %v234, 0
        %255 = vmatprep.subr.bf16.mxu0 0
        %256 = vmatpush1.bf16.msra.mxu0 %v247
        %257 = vmatprep.subr.bf16.mxu0 0
        %258 = vmatpush1.bf16.msra.mxu0 %v248
        %259 = vmatprep.subr.bf16.mxu0 0
        %260 = vmatpush1.bf16.msra.mxu0 0
        %261 = vmatprep.subr.bf16.mxu0 0
        %262 = vmatpush1.bf16.msra.mxu0 0
        %263 = vmatprep.subr.bf16.mxu0 0
        %264 = vmatpush1.bf16.msra.mxu0 0
        %265 = vmatprep.subr.bf16.mxu0 0
        %266 = vmatpush1.bf16.msra.mxu0 0
        %267 = vmatprep.subr.bf16.mxu0 0
        %268 = vmatpush1.bf16.msra.mxu0 0
        %269 = vmatprep.subr.bf16.mxu0 0
        %270 = vmatpush1.bf16.msra.mxu0 0
        %271 = vmatprep.subr.bf16.mxu0 0
        %272 = vmatpush1.bf16.msra.mxu0 0
        %273 = vmatprep.subr.bf16.mxu0 0
        %274 = vmatpush1.bf16.msra.mxu0 0
        %275 = vmatprep.subr.bf16.mxu0 0
        %276 = vmatpush1.bf16.msra.mxu0 0
        %277 = vmatprep.subr.bf16.mxu0 0
        %278 = vmatpush1.bf16.msra.mxu0 0
        %279 = vmatprep.subr.bf16.mxu0 0
        %280 = vmatpush1.bf16.msra.mxu0 0
        %281 = vmatprep.subr.bf16.mxu0 0
        %282 = vmatpush1.bf16.msra.mxu0 0
        %283 = vmatprep.subr.bf16.mxu0 0
        %284 = vmatpush1.bf16.msra.mxu0 0
        %285 = vmatprep.subr.bf16.mxu0 0
        %286 = vmatpush1.bf16.msra.mxu0 0
        %287 = vmatprep.mubr.bf16.mxu0 0
        %288 = vmatmul.mubr.bf16.gmra.mrb[0].mxu0 %v253
        %v289 = vpop.f32.mrb[0].mxu0
        %v290 = vadd.f32 0.0, %v289
        %v291 = vpop.f32.mrb[0].mxu0
        %v292 = vpop.f32.mrb[0].mxu0
        %v293 = vadd.f32 0.0, %v292
        %v294 = vpop.f32.mrb[0].mxu0
        %295 = vdwg.mxu0
        %v296 = vld [vmem:[%s2] sm:$0x1]
        %v297 = vld [vmem:[%s3] sm:$0x1]
        %v298 = vsel %vm251, %v290, 0.0
        %v299 = vsel %vm251, %v293, 0.0
        %v300 = vadd.f32 %v298, %v299
        %v301 = vrot.slane %v300, 4
        %v302 = vadd.f32 %v300, %v301
        %v303 = vrot.slane %v302, 2
        %v304 = vadd.f32 %v302, %v303
        %v305 = vrot.slane %v304, 1
        %v306 = vadd.f32 %v304, %v305
        %v307 = vmul.f32 %v306, 0.0625
        %v308 = vsub.f32 %v290, %v307
        %v309 = vsub.f32 %v293, %v307
        %v310 = vmul.f32 %v308, %v308
        %v311 = vmul.f32 %v309, %v309
        %v312 = vsel %vm251, %v310, 0.0
        %v313 = vsel %vm251, %v311, 0.0
        %v314 = vadd.f32 %v312, %v313
        %v315 = vrot.slane %v314, 4
        %v316 = vadd.f32 %v314, %v315
        %v317 = vrot.slane %v316, 2
        %v318 = vadd.f32 %v316, %v317
        %v319 = vrot.slane %v318, 1
        %v320 = vadd.f32 %v318, %v319
        %v321 = vmul.f32 %v320, 0.0625
        %v322 = vadd.f32 %v321, 1e-05
        %v323 = vrsqrt.pop %v322
        %v324 = vmul.f32 %v296, %v323
        %v325 = vmul.f32 %v307, %v324
        %v326 = vsub.f32 %v297, %v325
        %v328 = vlaneseq
        %v329 = vshrl.u32 %v328, 7
        %v330 = vsub.s32 0, %v329
        %v331 = vrot.slane %v324, %v330
        %v333 = vmul.f32 %v290, %v331
        %v334 = vmul.f32 %v293, %v331
        %v336 = vlaneseq
        %v337 = vshrl.u32 %v336, 7
        %v338 = vsub.s32 0, %v337
        %v339 = vrot.slane %v326, %v338
        %v341 = vadd.f32 %v333, %v339
        %v342 = vadd.f32 %v334, %v339
        %v343 = vmax.f32 %v341, 0.0
        %v344 = vmax.f32 %v342, 0.0
        %v345 = vpack.c.bf16 %v344, %v343
        %v347 = vunpack.c.l.b16 %v345
        %v348 = vunpack.c.h.b16 %v345
        %v349 = vpack.c.b16 %v347, %v347
        %v350 = vpack.c.b16 %v348, %v348
        %vm353 = vcmask 257024
        %354 = vst.msk [vmem:[%s230] sm:$0xf] %vm353, %v349
        %355 = vst.msk [vmem:[%s230 + $0x4] sm:$0xf] %vm353, %v350
        %s356 = sand.u32 %s119, 1
        %s357 = scalar_lea.sflag [#allocation4], %s356
        %s358 = sand.u32 %s119, 1
        %s359 = smul.addr %s358, 8
        %s360 = scalar_lea.vmem [#allocation7], %s359
        // Predicated region
        $region45: #{tpu_custom_call.1} parent=35 // pred_check
          %p361 = pneg %p129
        $region46: #{tpu_custom_call.1} parent=35 // pred_check_branch
          %363 = sbr.rel (%p361) target = $region48
        $region47: #{tpu_custom_call.1} parent=35 // pred_region
          %s365 = ssub.s32 128, 128
          %366 = vsyncadd %s357, %s365
          %s367 = smul.addr %s22, 2
          %s368 = smul.addr %s367, 64
          %s369 = scalar_lea.hbm %s4, %s368
          %s370 = sshll.u32 %s360, 4
          %s371 = int_to_ptr.vmem [resolvable:$true] %s370
          %376 = dma.vmem_to_hbm [thread:$0]  %s371, 128, %s369, %s357, 64, 64, 4
        $region48: #{tpu_custom_call.1} parent=35 // pred_fallthru
          _
      $region36: #{tpu_custom_call.1} parent=5 // pred_fallthru
        _
      %p377 = scmp.le.s32.totalorder 2, %s17
      // Predicated region
      $region49: #{tpu_custom_call.1} parent=5 // pred_check
        %p378 = pneg %p377
      $region50: #{tpu_custom_call.1} parent=5 // pred_check_branch
        %380 = sbr.rel (%p378) target = $region52
      $region51: #{tpu_custom_call.1} parent=5 // pred_region
        %s381 = ssub.s32 %s17, 2
        // Predicated region
        $region53: #{tpu_custom_call.1} parent=51 // pred_check
          %p382 = pneg %p135
        $region54: #{tpu_custom_call.1} parent=51 // pred_check_branch
          %384 = sbr.rel (%p382) target = $region56
        $region55: #{tpu_custom_call.1} parent=51 // pred_region
          %s385 = sand.u32 %s120, 1
          %s386 = scalar_lea.sflag [#allocation4], %s385
          %s387 = sand.u32 %s120, 1
          %s388 = smul.addr %s387, 8
          %s389 = scalar_lea.vmem [#allocation7], %s388
          %390 = dma.done %s386, 128
        $region56: #{tpu_custom_call.1} parent=51 // pred_fallthru
          _
      $region52: #{tpu_custom_call.1} parent=5 // pred_fallthru
        _
    $region6: #{tpu_custom_call.1} parent=1 // loop_footer
      %s21 = sadd.s32 1, %s17
    $region7: #{tpu_custom_call.1} parent=1 // loop_footer_branch
      %16 = sbr.rel target = $region3
    $region8: #{tpu_custom_call.1} parent=1 // loop_exit
      _
    %391 = vsyncpa [#allocation3], 1
    %s392 = scalar_lea.sflag [#allocation3], 1
    %393 = vsyncpa %s392, 1
    %394 = vsyncpa [#allocation6], 1
    %395 = vsyncpa [#allocation4], 1
    %s396 = scalar_lea.sflag [#allocation4], 1
    %397 = vsyncpa %s396, 1

</llo_original>
